<compile_context>
chip_gen: v5e
topology: v5e:2x2
jax: 0.10.0
libtpu: 0.0.40
codegen_flags: <defaults>
</compile_context>

<pallas_src>
import functools

import jax
import jax.numpy as jnp
from jax.experimental import pallas as pl
from jax.experimental.pallas import tpu as pltpu

BN_EPS = 1e-5
LANE = 128
SUBLANE = 8


def _round_up(x, m):
    return (x + m - 1) // m * m


# -----------------------------------------------------------------------------
# Kernel bodies
# -----------------------------------------------------------------------------
def _masked_stat_update(z, sum_ref, sq_ref, *, batch_tile, n_valid):
    """Accumulate per-feature sum / sum-of-squares over the *real* batch rows."""
    step = pl.program_id(0)

    @pl.when(step == 0)
    def _():
        sum_ref[...] = jnp.zeros_like(sum_ref)
        sq_ref[...] = jnp.zeros_like(sq_ref)

    rows = (jax.lax.broadcasted_iota(jnp.int32, (batch_tile, 1), 0)
            + step * batch_tile)
    mask = (rows < n_valid).astype(jnp.float32)       # zero out padded rows
    zm = z * mask
    sum_ref[...] += jnp.sum(zm, axis=0, keepdims=True)
    sq_ref[...] += jnp.sum(zm * z, axis=0, keepdims=True)


def _bn_relu(z, sum_ref, sq_ref, gamma_ref, beta_ref, *, n_valid):
    """Training-mode BatchNorm folded into one FMA, then ReLU (all f32)."""
    inv_n = 1.0 / float(n_valid)
    mean = sum_ref[...] * inv_n
    var = jnp.maximum(sq_ref[...] * inv_n - mean * mean, 0.0)
    s = gamma_ref[...] * jax.lax.rsqrt(var + BN_EPS)   # EUP rsqrt (free slot)
    t = beta_ref[...] - mean * s
    return jnp.maximum(z * s + t, 0.0)                 # single FMA + select


def _head_kernel(x_ref, enc_w_ref, enc_b_ref, w0_ref, b0_ref,
                 z_ref, sum_ref, sq_ref, *, batch_tile, n_valid):
    # encoder: Linear + ReLU (MXU, f32 accumulation)
    h = jnp.dot(x_ref[...], enc_w_ref[...],
                preferred_element_type=jnp.float32) + enc_b_ref[...]
    h = jnp.maximum(h, 0.0)
    # first classifier Linear
    z = jnp.dot(h.astype(w0_ref.dtype), w0_ref[...],
                preferred_element_type=jnp.float32) + b0_ref[...]
    z_ref[...] = z
    _masked_stat_update(z, sum_ref, sq_ref,
                        batch_tile=batch_tile, n_valid=n_valid)


def _mid_kernel(z_ref, sum_in_ref, sq_in_ref, gamma_ref, beta_ref,
                w_ref, b_ref,
                z_out_ref, sum_out_ref, sq_out_ref, *, batch_tile, n_valid):
    h = _bn_relu(z_ref[...], sum_in_ref, sq_in_ref, gamma_ref, beta_ref,
                 n_valid=n_valid)
    z = jnp.dot(h.astype(w_ref.dtype), w_ref[...],
                preferred_element_type=jnp.float32) + b_ref[...]
    z_out_ref[...] = z
    _masked_stat_update(z, sum_out_ref, sq_out_ref,
                        batch_tile=batch_tile, n_valid=n_valid)


def _tail_kernel(z_ref, sum_ref, sq_ref, gamma_ref, beta_ref,
                 w_ref, b_ref, out_ref, *, n_valid):
    h = _bn_relu(z_ref[...], sum_ref, sq_ref, gamma_ref, beta_ref,
                 n_valid=n_valid)
    out_ref[...] = (jnp.dot(h.astype(w_ref.dtype), w_ref[...],
                            preferred_element_type=jnp.float32)
                    + b_ref[...]).astype(out_ref.dtype)


# -----------------------------------------------------------------------------
# Wrapper
# -----------------------------------------------------------------------------
def _pad2(a, rows, cols, dtype):
    out = jnp.zeros((rows, cols), dtype)
    return out.at[:a.shape[0], :a.shape[1]].set(a.astype(dtype))


def _nbytes(shapes_dtypes):
    tot = 0
    for shape, dt in shapes_dtypes:
        n = 1
        for d in shape:
            n *= int(d)
        tot += n * jnp.dtype(dt).itemsize
    return tot


def _compiler_params(semantics, block_shapes_dtypes):
    # double-buffered blocks + small margin; clamp to a v7x-safe scoped limit
    est = 2 * _nbytes(block_shapes_dtypes) + (2 << 20)
    return pltpu.CompilerParams(
        dimension_semantics=semantics,
        vmem_limit_bytes=int(min(max(est, 4 << 20), 64 << 20)))


def classifier_forward(x_flat, params, *, classifier_depth, num_classes,
                       batch_tile=256, matmul_dtype=jnp.float32):
    """x_flat: (N, input_dim) float32. params: unpadded dict (weights as (in, out))."""
    assert classifier_depth >= 1
    n, input_dim = x_flat.shape
    latent_dim = params["enc_w"].shape[1]
    classifier_dim = params["w0"].shape[1]

    f32 = jnp.float32
    mm = matmul_dtype

    # lane-dense padded dims
    in_p = _round_up(input_dim, LANE)
    lat_p = _round_up(latent_dim, LANE)
    cls_p = _round_up(classifier_dim, LANE)
    nc_p = _round_up(num_classes, LANE)

    # batch tile (multiple of 8 sublanes); pad batch to a multiple of the tile
    tb = max(SUBLANE, min(_round_up(batch_tile, SUBLANE), _round_up(n, SUBLANE)))
    n_pad = _round_up(n, tb)
    n_tiles = n_pad // tb

    # ---- pad + cast parameters (weights pre-transposed to (in, out)) ----
    x_p = _pad2(x_flat, n_pad, in_p, mm)
    enc_w = _pad2(params["enc_w"], in_p, lat_p, mm)
    enc_b = _pad2(params["enc_b"], 1, lat_p, f32)
    ws, bs, gs, betas = [], [], [], []
    prev_p = lat_p
    for i in range(classifier_depth):
        ws.append(_pad2(params[f"w{i}"], prev_p, cls_p, mm))
        bs.append(_pad2(params[f"b{i}"], 1, cls_p, f32))
        gs.append(_pad2(params[f"gamma{i}"], 1, cls_p, f32))   # padded gamma = 0
        betas.append(_pad2(params[f"beta{i}"], 1, cls_p, f32))
        prev_p = cls_p
    fw = _pad2(params["final_w"], cls_p, nc_p, mm)
    fb = _pad2(params["final_b"], 1, nc_p, f32)

    tile_map = lambda i: (i, 0)   # streams with the batch grid
    res_map = lambda i: (0, 0)    # resident (DMA'd once, stays in VMEM)

    # ---- head: encoder Linear+ReLU -> Linear0 -> stats0 -------------------
    head_blocks = [((tb, in_p), mm), ((in_p, lat_p), mm), ((1, lat_p), f32),
                   ((lat_p, cls_p), mm), ((1, cls_p), f32),
                   ((tb, cls_p), f32), ((1, cls_p), f32), ((1, cls_p), f32)]
    head_flops = 2 * n_pad * (in_p * lat_p + lat_p * cls_p)
    head_bytes = _nbytes([((n_pad, in_p), mm), ((in_p, lat_p), mm),
                          ((lat_p, cls_p), mm), ((n_pad, cls_p), f32)])
    z, bn_sum, bn_sq = pl.pallas_call(
        functools.partial(_head_kernel, batch_tile=tb, n_valid=n),
        grid=(n_tiles,),
        in_specs=[pl.BlockSpec((tb, in_p), tile_map),
                  pl.BlockSpec((in_p, lat_p), res_map),
                  pl.BlockSpec((1, lat_p), res_map),
                  pl.BlockSpec((lat_p, cls_p), res_map),
                  pl.BlockSpec((1, cls_p), res_map)],
        out_specs=(pl.BlockSpec((tb, cls_p), tile_map),
                   pl.BlockSpec((1, cls_p), res_map),
                   pl.BlockSpec((1, cls_p), res_map)),
        out_shape=(jax.ShapeDtypeStruct((n_pad, cls_p), f32),
                   jax.ShapeDtypeStruct((1, cls_p), f32),
                   jax.ShapeDtypeStruct((1, cls_p), f32)),
        compiler_params=_compiler_params(("arbitrary",), head_blocks),
        cost_estimate=pl.CostEstimate(flops=int(head_flops), transcendentals=0,
                                      bytes_accessed=int(head_bytes)),
    )(x_p, enc_w, enc_b, ws[0], bs[0])

    # ---- mid layers: BN_i + ReLU + Linear_{i+1} -> stats_{i+1} ------------
    for i in range(classifier_depth - 1):
        mid_blocks = [((tb, cls_p), f32)] + [((1, cls_p), f32)] * 4 + \
                     [((cls_p, cls_p), mm), ((1, cls_p), f32),
                      ((tb, cls_p), f32), ((1, cls_p), f32), ((1, cls_p), f32)]
        mid_flops = 2 * n_pad * cls_p * cls_p
        mid_bytes = _nbytes([((n_pad, cls_p), f32), ((cls_p, cls_p), mm),
                             ((n_pad, cls_p), f32)])
        z, bn_sum, bn_sq = pl.pallas_call(
            functools.partial(_mid_kernel, batch_tile=tb, n_valid=n),
            grid=(n_tiles,),
            in_specs=[pl.BlockSpec((tb, cls_p), tile_map),
                      pl.BlockSpec((1, cls_p), res_map),
                      pl.BlockSpec((1, cls_p), res_map),
                      pl.BlockSpec((1, cls_p), res_map),
                      pl.BlockSpec((1, cls_p), res_map),
                      pl.BlockSpec((cls_p, cls_p), res_map),
                      pl.BlockSpec((1, cls_p), res_map)],
            out_specs=(pl.BlockSpec((tb, cls_p), tile_map),
                       pl.BlockSpec((1, cls_p), res_map),
                       pl.BlockSpec((1, cls_p), res_map)),
            out_shape=(jax.ShapeDtypeStruct((n_pad, cls_p), f32),
                       jax.ShapeDtypeStruct((1, cls_p), f32),
                       jax.ShapeDtypeStruct((1, cls_p), f32)),
            compiler_params=_compiler_params(("arbitrary",), mid_blocks),
            cost_estimate=pl.CostEstimate(flops=int(mid_flops),
                                          transcendentals=int(n_tiles * cls_p),
                                          bytes_accessed=int(mid_bytes)),
        )(z, bn_sum, bn_sq, gs[i], betas[i], ws[i + 1], bs[i + 1])

    # ---- tail: BN_last + ReLU + final Linear (lane-dense logits) ----------
    last = classifier_depth - 1
    tail_blocks = [((tb, cls_p), f32)] + [((1, cls_p), f32)] * 4 + \
                  [((cls_p, nc_p), mm), ((1, nc_p), f32), ((tb, nc_p), f32)]
    tail_flops = 2 * n_pad * cls_p * nc_p
    tail_bytes = _nbytes([((n_pad, cls_p), f32), ((cls_p, nc_p), mm),
                          ((n_pad, nc_p), f32)])
    logits = pl.pallas_call(
        functools.partial(_tail_kernel, n_valid=n),
        grid=(n_tiles,),
        in_specs=[pl.BlockSpec((tb, cls_p), tile_map),
                  pl.BlockSpec((1, cls_p), res_map),
                  pl.BlockSpec((1, cls_p), res_map),
                  pl.BlockSpec((1, cls_p), res_map),
                  pl.BlockSpec((1, cls_p), res_map),
                  pl.BlockSpec((cls_p, nc_p), res_map),
                  pl.BlockSpec((1, nc_p), res_map)],
        out_specs=pl.BlockSpec((tb, nc_p), tile_map),
        out_shape=jax.ShapeDtypeStruct((n_pad, nc_p), f32),
        compiler_params=_compiler_params(("parallel",), tail_blocks),
        cost_estimate=pl.CostEstimate(flops=int(tail_flops),
                                      transcendentals=int(n_tiles * cls_p),
                                      bytes_accessed=int(tail_bytes)),
    )(z, bn_sum, bn_sq, gs[last], betas[last], fw, fb)

    # slice real batch rows and real classes (padding discarded)
    return logits[:n, :num_classes]


# -----------------------------------------------------------------------------
# Params + pure-JAX reference
# -----------------------------------------------------------------------------
def init_params(key, *, input_dim, latent_dim, classifier_dim,
                classifier_depth, num_classes):
    """Deterministic parameter init. Linear weights stored as (in, out)."""
    params = {}
    key, k = jax.random.split(key)
    params["enc_w"] = (jax.random.normal(k, (input_dim, latent_dim), jnp.float32)
                       * (1.0 / jnp.sqrt(input_dim)))
    params["enc_b"] = jnp.zeros((1, latent_dim), jnp.float32)

    in_dim = latent_dim
    for i in range(classifier_depth):
        key, k = jax.random.split(key)
        params[f"w{i}"] = (jax.random.normal(k, (in_dim, classifier_dim),
                                             jnp.float32)
                           * (1.0 / jnp.sqrt(in_dim)))
        params[f"b{i}"] = jnp.zeros((1, classifier_dim), jnp.float32)
        params[f"gamma{i}"] = jnp.ones((1, classifier_dim), jnp.float32)
        params[f"beta{i}"] = jnp.zeros((1, classifier_dim), jnp.float32)
        in_dim = classifier_dim

    key, k = jax.random.split(key)
    params["final_w"] = (jax.random.normal(k, (in_dim, num_classes), jnp.float32)
                         * (1.0 / jnp.sqrt(in_dim)))
    params["final_b"] = jnp.zeros((1, num_classes), jnp.float32)
    return params


def reference_forward(x_flat, params, *, classifier_depth):
    """Pure-JAX reference mirroring the PyTorch forward (training-mode BN)."""
    h = jnp.maximum(x_flat @ params["enc_w"] + params["enc_b"], 0.0)
    for i in range(classifier_depth):
        z = h @ params[f"w{i}"] + params[f"b{i}"]
        mean = jnp.mean(z, axis=0, keepdims=True)
        var = jnp.mean((z - mean) ** 2, axis=0, keepdims=True)
        z = params[f"gamma{i}"] * (z - mean) / jnp.sqrt(var + BN_EPS) \
            + params[f"beta{i}"]
        h = jnp.maximum(z, 0.0)
    return h @ params["final_w"] + params["final_b"]


if __name__ == "__main__":
    # Small hparams consistent with the module.
    batch = 48                     # not a multiple of the batch tile -> tests masking
    c, hgt, wid = 4, 4, 4          # image-like input, flattened as in getAcc
    input_dim = c * hgt * wid      # 64
    latent_dim = 32                # encoder.latent_dim
    classifier_dim = 32            # hparams['classifier_dim']
    classifier_depth = 2           # hparams['classifier_depth']
    num_classes = 10               # hparams['num_classes']

    key = jax.random.PRNGKey(0)
    key, kx = jax.random.split(key)
    x = jax.random.normal(kx, (batch, c, hgt, wid), jnp.float32)
    x_flat = x.reshape(batch, -1)  # flattened_X = X.view(X.shape[0], -1)

    params = init_params(key,
                         input_dim=input_dim,
                         latent_dim=latent_dim,
                         classifier_dim=classifier_dim,
                         classifier_depth=classifier_depth,
                         num_classes=num_classes)

    ref = reference_forward(x_flat, params, classifier_depth=classifier_depth)

    # f32 matmul path: exact semantics of the PyTorch module.  batch_tile=32
    # gives 2 grid steps so the cross-tile BN stats accumulation is exercised.
    out = classifier_forward(x_flat, params,
                             classifier_depth=classifier_depth,
                             num_classes=num_classes,
                             batch_tile=32)
    out = jax.block_until_ready(out)
    assert out.shape == (batch, num_classes)
    assert jnp.allclose(out, ref, atol=5e-4, rtol=5e-4), "f32 mismatch vs reference"

    # bf16 matmul path (v6e/v7x MXU-friendly); BN stats / accumulation stay f32.
    out_bf16 = classifier_forward(x_flat, params,
                                  classifier_depth=classifier_depth,
                                  num_classes=num_classes,
                                  batch_tile=32,
                                  matmul_dtype=jnp.bfloat16)
    out_bf16 = jax.block_until_ready(out_bf16)
    assert out_bf16.shape == (batch, num_classes)
    assert bool(jnp.all(jnp.isfinite(out_bf16)))
    assert float(jnp.max(jnp.abs(out_bf16 - ref))) < 0.5, "bf16 path too far off"

    print("KERNEL_OK")
</pallas_src>

<mosaic_0001>
module attributes {stable_mosaic.version = 11 : i64} {
  func.func @_head_kernel(%arg0: i32, %arg1: memref<32x128xf32, #tpu.memory_space<vmem>>, %arg2: memref<128x128xf32, #tpu.memory_space<vmem>>, %arg3: memref<1x128xf32, #tpu.memory_space<vmem>>, %arg4: memref<128x128xf32, #tpu.memory_space<vmem>>, %arg5: memref<1x128xf32, #tpu.memory_space<vmem>>, %arg6: memref<32x128xf32, #tpu.memory_space<vmem>>, %arg7: memref<1x128xf32, #tpu.memory_space<vmem>>, %arg8: memref<1x128xf32, #tpu.memory_space<vmem>>) attributes {dimension_semantics = [#tpu.dimension_semantics<arbitrary>], iteration_bounds = array<i64: 2>, scalar_prefetch = 0 : i64, scratch_operands = 0 : i64, tpu.core_type = #tpu.core_type<tc>, window_params = [{transform_indices = @transform_0, window_bounds = array<i64: 32, 128>}, {pipeline_mode = #tpu.pipeline_mode<synchronous>, transform_indices = @transform_1, window_bounds = array<i64: 128, 128>}, {pipeline_mode = #tpu.pipeline_mode<synchronous>, transform_indices = @transform_2, window_bounds = array<i64: 1, 128>}, {pipeline_mode = #tpu.pipeline_mode<synchronous>, transform_indices = @transform_3, window_bounds = array<i64: 128, 128>}, {pipeline_mode = #tpu.pipeline_mode<synchronous>, transform_indices = @transform_4, window_bounds = array<i64: 1, 128>}, {transform_indices = @transform_5, window_bounds = array<i64: 32, 128>}, {pipeline_mode = #tpu.pipeline_mode<synchronous>, transform_indices = @transform_6, window_bounds = array<i64: 1, 128>}, {pipeline_mode = #tpu.pipeline_mode<synchronous>, transform_indices = @transform_7, window_bounds = array<i64: 1, 128>}]} {
    %c0 = arith.constant 0 : index
    %c0_0 = arith.constant 0 : index
    %0 = vector.load %arg1[%c0, %c0_0] : memref<32x128xf32, #tpu.memory_space<vmem>>, vector<32x128xf32>
    %c0_1 = arith.constant 0 : index
    %c0_2 = arith.constant 0 : index
    %1 = vector.load %arg2[%c0_1, %c0_2] : memref<128x128xf32, #tpu.memory_space<vmem>>, vector<128x128xf32>
    %cst = arith.constant dense<0.000000e+00> : vector<32x128xf32>
    %2 = tpu.matmul %0, %1, %cst {dimension_numbers = #tpu.dot_dimension_numbers<[1], [0], [0], [1], [0, 0, 1, 1], [], []>} : vector<32x128xf32>, vector<128x128xf32>, vector<32x128xf32> -> vector<32x128xf32>
    %c0_3 = arith.constant 0 : index
    %c0_4 = arith.constant 0 : index
    %3 = vector.load %arg3[%c0_3, %c0_4] : memref<1x128xf32, #tpu.memory_space<vmem>>, vector<1x128xf32>
    %4 = vector.broadcast %3 : vector<1x128xf32> to vector<32x128xf32>
    %5 = arith.addf %2, %4 : vector<32x128xf32>
    %cst_5 = arith.constant 0.000000e+00 : f32
    %6 = vector.broadcast %cst_5 : f32 to vector<32x128xf32>
    %7 = arith.maximumf %5, %6 : vector<32x128xf32>
    %c0_6 = arith.constant 0 : index
    %c0_7 = arith.constant 0 : index
    %8 = vector.load %arg4[%c0_6, %c0_7] : memref<128x128xf32, #tpu.memory_space<vmem>>, vector<128x128xf32>
    %cst_8 = arith.constant dense<0.000000e+00> : vector<32x128xf32>
    %9 = tpu.matmul %7, %8, %cst_8 {dimension_numbers = #tpu.dot_dimension_numbers<[1], [0], [0], [1], [0, 0, 1, 1], [], []>} : vector<32x128xf32>, vector<128x128xf32>, vector<32x128xf32> -> vector<32x128xf32>
    %c0_9 = arith.constant 0 : index
    %c0_10 = arith.constant 0 : index
    %10 = vector.load %arg5[%c0_9, %c0_10] : memref<1x128xf32, #tpu.memory_space<vmem>>, vector<1x128xf32>
    %11 = vector.broadcast %10 : vector<1x128xf32> to vector<32x128xf32>
    %12 = arith.addf %9, %11 : vector<32x128xf32>
    %c0_11 = arith.constant 0 : index
    %c0_12 = arith.constant 0 : index
    %13 = vector.load %arg6[%c0_11, %c0_12] : memref<32x128xf32, #tpu.memory_space<vmem>>, vector<32x128xf32>
    tpu.vector_store %arg6[%c0_11, %c0_12], %12 {strides = array<i32>} : memref<32x128xf32, #tpu.memory_space<vmem>>, vector<32x128xf32>,
    %c0_i32 = arith.constant 0 : i32
    %14 = arith.cmpi eq, %arg0, %c0_i32 : i32
    %15 = arith.extui %14 : i1 to i32
    %c0_i32_13 = arith.constant 0 : i32
    %16 = arith.cmpi ne, %15, %c0_i32_13 : i32
    scf.if %16 {
      %cst_24 = arith.constant 0.000000e+00 : f32
      %38 = vector.broadcast %cst_24 : f32 to vector<1x128xf32>
      %c0_25 = arith.constant 0 : index
      %c0_26 = arith.constant 0 : index
      %39 = vector.load %arg7[%c0_25, %c0_26] : memref<1x128xf32, #tpu.memory_space<vmem>>, vector<1x128xf32>
      tpu.vector_store %arg7[%c0_25, %c0_26], %38 {strides = array<i32>} : memref<1x128xf32, #tpu.memory_space<vmem>>, vector<1x128xf32>,
      %cst_27 = arith.constant 0.000000e+00 : f32
      %40 = vector.broadcast %cst_27 : f32 to vector<1x128xf32>
      %c0_28 = arith.constant 0 : index
      %c0_29 = arith.constant 0 : index
      %41 = vector.load %arg8[%c0_28, %c0_29] : memref<1x128xf32, #tpu.memory_space<vmem>>, vector<1x128xf32>
      tpu.vector_store %arg8[%c0_28, %c0_29], %40 {strides = array<i32>} : memref<1x128xf32, #tpu.memory_space<vmem>>, vector<1x128xf32>,
    } else {
    }
    %17 = tpu.iota {dimensions = array<i32: 0>} : vector<32x1xi32>
    %c32_i32 = arith.constant 32 : i32
    %18 = arith.muli %arg0, %c32_i32 : i32
    %19 = vector.broadcast %18 : i32 to vector<32x1xi32>
    %20 = arith.addi %17, %19 : vector<32x1xi32>
    %c48_i32 = arith.constant 48 : i32
    %21 = vector.broadcast %c48_i32 : i32 to vector<32x1xi32>
    %22 = arith.cmpi slt, %20, %21 : vector<32x1xi32>
    %23 = arith.extui %22 : vector<32x1xi1> to vector<32x1xi32>
    %24 = arith.sitofp %23 : vector<32x1xi32> to vector<32x1xf32>
    %25 = vector.broadcast %24 : vector<32x1xf32> to vector<32x128xf32>
    %26 = arith.mulf %12, %25 : vector<32x128xf32>
    %c0_14 = arith.constant 0 : index
    %c0_15 = arith.constant 0 : index
    %27 = vector.load %arg7[%c0_14, %c0_15] : memref<1x128xf32, #tpu.memory_space<vmem>>, vector<1x128xf32>
    %cst_16 = arith.constant dense<0.000000e+00> : vector<128xf32>
    %28 = vector.multi_reduction <add>, %26, %cst_16 [0] : vector<32x128xf32> to vector<128xf32>
    %29 = vector.shape_cast %28 : vector<128xf32> to vector<1x128xf32>
    %30 = arith.addf %27, %29 : vector<1x128xf32>
    %c0_17 = arith.constant 0 : index
    %c0_18 = arith.constant 0 : index
    %31 = vector.load %arg7[%c0_17, %c0_18] : memref<1x128xf32, #tpu.memory_space<vmem>>, vector<1x128xf32>
    tpu.vector_store %arg7[%c0_17, %c0_18], %30 {strides = array<i32>} : memref<1x128xf32, #tpu.memory_space<vmem>>, vector<1x128xf32>,
    %c0_19 = arith.constant 0 : index
    %c0_20 = arith.constant 0 : index
    %32 = vector.load %arg8[%c0_19, %c0_20] : memref<1x128xf32, #tpu.memory_space<vmem>>, vector<1x128xf32>
    %33 = arith.mulf %26, %12 : vector<32x128xf32>
    %cst_21 = arith.constant dense<0.000000e+00> : vector<128xf32>
    %34 = vector.multi_reduction <add>, %33, %cst_21 [0] : vector<32x128xf32> to vector<128xf32>
    %35 = vector.shape_cast %34 : vector<128xf32> to vector<1x128xf32>
    %36 = arith.addf %32, %35 : vector<1x128xf32>
    %c0_22 = arith.constant 0 : index
    %c0_23 = arith.constant 0 : index
    %37 = vector.load %arg8[%c0_22, %c0_23] : memref<1x128xf32, #tpu.memory_space<vmem>>, vector<1x128xf32>
    tpu.vector_store %arg8[%c0_22, %c0_23], %36 {strides = array<i32>} : memref<1x128xf32, #tpu.memory_space<vmem>>, vector<1x128xf32>,
    return
  }
  func.func @transform_0(%arg0: i32) -> (i32, i32) {
    %c0_i32 = arith.constant 0 : i32
    %c0_i32_0 = arith.constant 0 : i32
    return %arg0, %c0_i32 : i32, i32
  }
  func.func @transform_1(%arg0: i32) -> (i32, i32) {
    %c0_i32 = arith.constant 0 : i32
    %c0_i32_0 = arith.constant 0 : i32
    %c0_i32_1 = arith.constant 0 : i32
    return %c0_i32, %c0_i32_0 : i32, i32
  }
  func.func @transform_2(%arg0: i32) -> (i32, i32) {
    %c0_i32 = arith.constant 0 : i32
    %c0_i32_0 = arith.constant 0 : i32
    %c0_i32_1 = arith.constant 0 : i32
    return %c0_i32, %c0_i32_0 : i32, i32
  }
  func.func @transform_3(%arg0: i32) -> (i32, i32) {
    %c0_i32 = arith.constant 0 : i32
    %c0_i32_0 = arith.constant 0 : i32
    %c0_i32_1 = arith.constant 0 : i32
    return %c0_i32, %c0_i32_0 : i32, i32
  }
  func.func @transform_4(%arg0: i32) -> (i32, i32) {
    %c0_i32 = arith.constant 0 : i32
    %c0_i32_0 = arith.constant 0 : i32
    %c0_i32_1 = arith.constant 0 : i32
    return %c0_i32, %c0_i32_0 : i32, i32
  }
  func.func @transform_5(%arg0: i32) -> (i32, i32) {
    %c0_i32 = arith.constant 0 : i32
    %c0_i32_0 = arith.constant 0 : i32
    return %arg0, %c0_i32 : i32, i32
  }
  func.func @transform_6(%arg0: i32) -> (i32, i32) {
    %c0_i32 = arith.constant 0 : i32
    %c0_i32_0 = arith.constant 0 : i32
    %c0_i32_1 = arith.constant 0 : i32
    return %c0_i32, %c0_i32_0 : i32, i32
  }
  func.func @transform_7(%arg0: i32) -> (i32, i32) {
    %c0_i32 = arith.constant 0 : i32
    %c0_i32_0 = arith.constant 0 : i32
    %c0_i32_1 = arith.constant 0 : i32
    return %c0_i32, %c0_i32_0 : i32, i32
  }
}

</mosaic_0001>

<llo_original>
// kernel: tpu_custom_call.1
$region0: #{tpu_custom_call.1}
  #allocation0 [shape = 'u32[]', space=smem, size = 0x4, offset = 0x4, fixed_abs, tag = 'smem constant byte address 0x4 - core index']
  #allocation1 [shape = 'u32[72,128]{1,0:T(1,128)}', space=vmem, size = 0x9000, scoped, tag = 'internal scratch']
  %s0 = inlined_call_operand.hbm [shape: f32[64,128], index: 0, kind: input, shape index: {}]
  %s1 = inlined_call_operand.hbm [shape: f32[128,128], index: 1, kind: input, shape index: {}]
  %s2 = inlined_call_operand.vmem [shape: f32[1,128], index: 2, kind: input, shape index: {}]
  %s3 = inlined_call_operand.hbm [shape: f32[128,128], index: 3, kind: input, shape index: {}]
  %s4 = inlined_call_operand.vmem [shape: f32[1,128], index: 4, kind: input, shape index: {}]
  %s5 = inlined_call_operand.hbm [shape: f32[64,128], index: 5, kind: output, shape index: {0}]
  %s6 = inlined_call_operand.hbm [shape: f32[1,128], index: 6, kind: output, shape index: {1}]
  %s7 = inlined_call_operand.hbm [shape: f32[1,128], index: 7, kind: output, shape index: {2}]
  %8 = xla_tuple %s5, %s6, %s7
  %s9 = sld [smem:[#allocation0]]
  $region85: #{tpu_custom_call.1} parent=0
    _
  %s11 = ssub.s32 1, %s9
  %s12 = scalar_select 0, %s11, %s9
  $region1: #{tpu_custom_call.1} parent=0
    #allocation2 [shape = 'u8[32768]{0}', space=vmem, size = 0x8000, scoped, tag = 'input window, operand 0']
    #allocation3 [shape = 's32[2]{0}', space=sflag, size = 0x8, scoped, tag = 'scoped memory for tpu_custom_call.1']
    #allocation4 [shape = 's32[2]{0}', space=sflag, size = 0x8, scoped, tag = 'scoped memory for tpu_custom_call.1']
    #allocation5 [shape = 'u8[65536]{0}', space=vmem, size = 0x10000, scoped, tag = 'input window, operand 1, single buffered']
    #allocation6 [shape = 's32[1]{0}', space=sflag, size = 0x4, scoped, tag = 'scoped memory for tpu_custom_call.1']
    #allocation7 [shape = 'u8[65536]{0}', space=vmem, size = 0x10000, scoped, tag = 'input window, operand 3, single buffered']
    #allocation8 [shape = 'u8[32768]{0}', space=vmem, size = 0x8000, scoped, tag = 'output window, operand 0']
    #allocation9 [shape = 'u8[512]{0}', space=vmem, size = 0x400, scoped, tag = 'output window, operand 1, single buffered']
    #allocation10 [shape = 's32[1]{0}', space=sflag, size = 0x4, scoped, tag = 'scoped memory for tpu_custom_call.1']
    #allocation11 [shape = 'u8[512]{0}', space=vmem, size = 0x400, scoped, tag = 'output window, operand 2, single buffered']
    %13 = vsyncpa [#allocation3], 0
    %s14 = scalar_lea.sflag [#allocation3], 1
    %15 = vsyncpa %s14, 0
    %16 = vsyncpa [#allocation6], 0
    %17 = vsyncpa [#allocation4], 0
    %s18 = scalar_lea.sflag [#allocation4], 1
    %19 = vsyncpa %s18, 0
    %20 = vsyncpa [#allocation10], 0
    loop: start=0, step=1, limit=4
    $region2: #{tpu_custom_call.1} parent=1 // loop_pre_header
      _
    $region3: #{tpu_custom_call.1} parent=1 // loop_header
      %s22 = sphi 0, %s26
      %p23 = scmp.ge.s32.totalorder %s22, 4
      %s32 = sphi 0, %s34
      %s35 = sphi 0, %s32
      %s36 = sphi 0, %s35
      %s52 = sphi 0, %s36
      %s56 = sphi 0, %s56
      %s58 = sphi 0, %s56
      %s59 = sphi 0, %s58
      %s73 = sphi 0, %s59
      %s77 = sphi 0, %s77
      %s79 = sphi 0, %s77
      %s80 = sphi 0, %s79
      %s94 = sphi 0, %s80
      %s98 = sphi 0, %s98
      %s100 = sphi 0, %s98
      %s101 = sphi 0, %s100
      %s115 = sphi 0, %s101
      %s119 = sphi 0, %s119
      %s121 = sphi 0, %s119
      %s122 = sphi 0, %s121
      %s136 = sphi 0, %s122
      %s142 = sphi 0, %s144
      %s145 = sphi 0, %s142
      %s146 = sphi 0, %s145
      %s162 = sphi 0, %s146
      %s166 = sphi 0, %s166
      %s168 = sphi 0, %s166
      %s169 = sphi 0, %s168
      %s183 = sphi 0, %s169
      %s187 = sphi 0, %s187
      %s189 = sphi 0, %s187
      %s190 = sphi 0, %s189
      %s204 = sphi 0, %s190
    $region4: #{tpu_custom_call.1} parent=1 // loop_header_branch
      %25 = sbr.rel (%p23) target = $region8
    $region5: #{tpu_custom_call.1} parent=1 // loop_body
      %s27 = ssub.s32 %s22, 1
      %s28 = ssub.s32 %s22, 2
      %s29 = sadd.s32 %s22, 1
      %s30 = ssub.s32 %s22, %s29
      %p31 = scmp.eq.s32.totalorder %s30, 0
      %s33 = sadd.s32 %s32, 1
      %s34 = scalar_select %p31, %s32, %s33
      %p37 = pneg %p31
      %p38 = scmp.eq.s32.totalorder %s22, 1
      %p39 = por %p37, %p38
      %p40 = scmp.ne.s32.totalorder %s32, %s35
      %p41 = scmp.eq.s32.totalorder %s22, 0
      %p42 = por %p40, %p41
      %p43 = scmp.ne.s32.totalorder %s32, %s35
      %p44 = scmp.eq.s32.totalorder %s27, 1
      %p45 = por %p43, %p44
      %p46 = scmp.ne.s32.totalorder %s35, %s36
      %p47 = scmp.eq.s32.totalorder %s27, 0
      %p48 = por %p46, %p47
      %p49 = scmp.ne.s32.totalorder %s35, %s36
      %p50 = scmp.eq.s32.totalorder %s28, 1
      %p51 = por %p49, %p50
      %p53 = scmp.ne.s32.totalorder %s36, %s52
      %p54 = scmp.eq.s32.totalorder %s28, 0
      %p55 = por %p53, %p54
      %s57 = sadd.s32 %s56, 1
      %p60 = scmp.eq.s32.totalorder %s22, 1
      %p61 = scmp.ne.s32.totalorder %s56, %s58
      %p62 = scmp.eq.s32.totalorder %s22, 0
      %p63 = por %p61, %p62
      %p64 = scmp.ne.s32.totalorder %s56, %s58
      %p65 = scmp.eq.s32.totalorder %s27, 1
      %p66 = por %p64, %p65
      %p67 = scmp.ne.s32.totalorder %s58, %s59
      %p68 = scmp.eq.s32.totalorder %s27, 0
      %p69 = por %p67, %p68
      %p70 = scmp.ne.s32.totalorder %s58, %s59
      %p71 = scmp.eq.s32.totalorder %s28, 1
      %p72 = por %p70, %p71
      %p74 = scmp.ne.s32.totalorder %s59, %s73
      %p75 = scmp.eq.s32.totalorder %s28, 0
      %p76 = por %p74, %p75
      %s78 = sadd.s32 %s77, 1
      %p81 = scmp.eq.s32.totalorder %s22, 1
      %p82 = scmp.ne.s32.totalorder %s77, %s79
      %p83 = scmp.eq.s32.totalorder %s22, 0
      %p84 = por %p82, %p83
      %p85 = scmp.ne.s32.totalorder %s77, %s79
      %p86 = scmp.eq.s32.totalorder %s27, 1
      %p87 = por %p85, %p86
      %p88 = scmp.ne.s32.totalorder %s79, %s80
      %p89 = scmp.eq.s32.totalorder %s27, 0
      %p90 = por %p88, %p89
      %p91 = scmp.ne.s32.totalorder %s79, %s80
      %p92 = scmp.eq.s32.totalorder %s28, 1
      %p93 = por %p91, %p92
      %p95 = scmp.ne.s32.totalorder %s80, %s94
      %p96 = scmp.eq.s32.totalorder %s28, 0
      %p97 = por %p95, %p96
      %s99 = sadd.s32 %s98, 1
      %p102 = scmp.eq.s32.totalorder %s22, 1
      %p103 = scmp.ne.s32.totalorder %s98, %s100
      %p104 = scmp.eq.s32.totalorder %s22, 0
      %p105 = por %p103, %p104
      %p106 = scmp.ne.s32.totalorder %s98, %s100
      %p107 = scmp.eq.s32.totalorder %s27, 1
      %p108 = por %p106, %p107
      %p109 = scmp.ne.s32.totalorder %s100, %s101
      %p110 = scmp.eq.s32.totalorder %s27, 0
      %p111 = por %p109, %p110
      %p112 = scmp.ne.s32.totalorder %s100, %s101
      %p113 = scmp.eq.s32.totalorder %s28, 1
      %p114 = por %p112, %p113
      %p116 = scmp.ne.s32.totalorder %s101, %s115
      %p117 = scmp.eq.s32.totalorder %s28, 0
      %p118 = por %p116, %p117
      %s120 = sadd.s32 %s119, 1
      %p123 = scmp.eq.s32.totalorder %s22, 1
      %p124 = scmp.ne.s32.totalorder %s119, %s121
      %p125 = scmp.eq.s32.totalorder %s22, 0
      %p126 = por %p124, %p125
      %p127 = scmp.ne.s32.totalorder %s119, %s121
      %p128 = scmp.eq.s32.totalorder %s27, 1
      %p129 = por %p127, %p128
      %p130 = scmp.ne.s32.totalorder %s121, %s122
      %p131 = scmp.eq.s32.totalorder %s27, 0
      %p132 = por %p130, %p131
      %p133 = scmp.ne.s32.totalorder %s121, %s122
      %p134 = scmp.eq.s32.totalorder %s28, 1
      %p135 = por %p133, %p134
      %p137 = scmp.ne.s32.totalorder %s122, %s136
      %p138 = scmp.eq.s32.totalorder %s28, 0
      %p139 = por %p137, %p138
      %s140 = ssub.s32 %s22, %s29
      %p141 = scmp.eq.s32.totalorder %s140, 0
      %s143 = sadd.s32 %s142, 1
      %s144 = scalar_select %p141, %s142, %s143
      %p147 = pneg %p141
      %p148 = scmp.eq.s32.totalorder %s22, 1
      %p149 = por %p147, %p148
      %p150 = scmp.ne.s32.totalorder %s142, %s145
      %p151 = scmp.eq.s32.totalorder %s22, 0
      %p152 = por %p150, %p151
      %p153 = scmp.ne.s32.totalorder %s142, %s145
      %p154 = scmp.eq.s32.totalorder %s27, 1
      %p155 = por %p153, %p154
      %p156 = scmp.ne.s32.totalorder %s145, %s146
      %p157 = scmp.eq.s32.totalorder %s27, 0
      %p158 = por %p156, %p157
      %p159 = scmp.ne.s32.totalorder %s145, %s146
      %p160 = scmp.eq.s32.totalorder %s28, 1
      %p161 = por %p159, %p160
      %p163 = scmp.ne.s32.totalorder %s146, %s162
      %p164 = scmp.eq.s32.totalorder %s28, 0
      %p165 = por %p163, %p164
      %s167 = sadd.s32 %s166, 1
      %p170 = scmp.eq.s32.totalorder %s22, 1
      %p171 = scmp.ne.s32.totalorder %s166, %s168
      %p172 = scmp.eq.s32.totalorder %s22, 0
      %p173 = por %p171, %p172
      %p174 = scmp.ne.s32.totalorder %s166, %s168
      %p175 = scmp.eq.s32.totalorder %s27, 1
      %p176 = por %p174, %p175
      %p177 = scmp.ne.s32.totalorder %s168, %s169
      %p178 = scmp.eq.s32.totalorder %s27, 0
      %p179 = por %p177, %p178
      %p180 = scmp.ne.s32.totalorder %s168, %s169
      %p181 = scmp.eq.s32.totalorder %s28, 1
      %p182 = por %p180, %p181
      %p184 = scmp.ne.s32.totalorder %s169, %s183
      %p185 = scmp.eq.s32.totalorder %s28, 0
      %p186 = por %p184, %p185
      %s188 = sadd.s32 %s187, 1
      %p191 = scmp.eq.s32.totalorder %s22, 1
      %p192 = scmp.ne.s32.totalorder %s187, %s189
      %p193 = scmp.eq.s32.totalorder %s22, 0
      %p194 = por %p192, %p193
      %p195 = scmp.ne.s32.totalorder %s187, %s189
      %p196 = scmp.eq.s32.totalorder %s27, 1
      %p197 = por %p195, %p196
      %p198 = scmp.ne.s32.totalorder %s189, %s190
      %p199 = scmp.eq.s32.totalorder %s27, 0
      %p200 = por %p198, %p199
      %p201 = scmp.ne.s32.totalorder %s189, %s190
      %p202 = scmp.eq.s32.totalorder %s28, 1
      %p203 = por %p201, %p202
      %p205 = scmp.ne.s32.totalorder %s190, %s204
      %p206 = scmp.eq.s32.totalorder %s28, 0
      %p207 = por %p205, %p206
      %p208 = scmp.le.s32.totalorder 1, %s22
      %p209 = scmp.lt.s32.totalorder %s22, 3
      %p210 = pnand %p208, %p209
      %p211 = pneg %p210
      // Predicated region
      $region9: #{tpu_custom_call.1} parent=5 // pred_check
        _
      $region10: #{tpu_custom_call.1} parent=5 // pred_check_branch
        %213 = sbr.rel (%p210) target = $region12
      $region11: #{tpu_custom_call.1} parent=5 // pred_region
        %s214 = ssub.s32 %s22, 1
        // Predicated region
        $region13: #{tpu_custom_call.1} parent=11 // pred_check
          %p215 = pneg %p69
        $region14: #{tpu_custom_call.1} parent=11 // pred_check_branch
          %217 = sbr.rel (%p215) target = $region16
        $region15: #{tpu_custom_call.1} parent=11 // pred_region
          %219 = vsyncadd [#allocation6], 0
          %s220 = sshll.u32 %s1, 4
          %s221 = int_to_ptr.hbm [resolvable:$true] %s220
          %s222 = sshll.u32 [#allocation5], 4
          %s223 = int_to_ptr.vmem [resolvable:$true] %s222
          %228 = dma.hbm_to_vmem [thread:$0]  %s221, 2048, %s223, [#allocation6], 128, 128, 8
        $region16: #{tpu_custom_call.1} parent=11 // pred_fallthru
          _
        // Predicated region
        $region17: #{tpu_custom_call.1} parent=11 // pred_check
          %p229 = pneg %p90
        $region18: #{tpu_custom_call.1} parent=11 // pred_check_branch
          %231 = sbr.rel (%p229) target = $region20
        $region19: #{tpu_custom_call.1} parent=11 // pred_region
          _
        $region20: #{tpu_custom_call.1} parent=11 // pred_fallthru
          _
        // Predicated region
        $region21: #{tpu_custom_call.1} parent=11 // pred_check
          %p232 = pneg %p111
        $region22: #{tpu_custom_call.1} parent=11 // pred_check_branch
          %234 = sbr.rel (%p232) target = $region24
        $region23: #{tpu_custom_call.1} parent=11 // pred_region
          %236 = vsyncadd [#allocation6], 0
          %s237 = sshll.u32 %s3, 4
          %s238 = int_to_ptr.hbm [resolvable:$true] %s237
          %s239 = sshll.u32 [#allocation7], 4
          %s240 = int_to_ptr.vmem [resolvable:$true] %s239
          %245 = dma.hbm_to_vmem [thread:$0]  %s238, 2048, %s240, [#allocation6], 128, 128, 8
        $region24: #{tpu_custom_call.1} parent=11 // pred_fallthru
          _
        // Predicated region
        $region25: #{tpu_custom_call.1} parent=11 // pred_check
          %p246 = pneg %p132
        $region26: #{tpu_custom_call.1} parent=11 // pred_check_branch
          %248 = sbr.rel (%p246) target = $region28
        $region27: #{tpu_custom_call.1} parent=11 // pred_region
          _
        $region28: #{tpu_custom_call.1} parent=11 // pred_fallthru
          _
      $region12: #{tpu_custom_call.1} parent=5 // pred_fallthru
        _
      %p249 = scmp.lt.s32.totalorder %s22, 2
      // Predicated region
      $region29: #{tpu_custom_call.1} parent=5 // pred_check
        %p250 = pneg %p249
      $region30: #{tpu_custom_call.1} parent=5 // pred_check_branch
        %252 = sbr.rel (%p250) target = $region32
      $region31: #{tpu_custom_call.1} parent=5 // pred_region
        // Predicated region
        $region33: #{tpu_custom_call.1} parent=31 // pred_check
          %p253 = pneg %p42
        $region34: #{tpu_custom_call.1} parent=31 // pred_check_branch
          %255 = sbr.rel (%p253) target = $region36
        $region35: #{tpu_custom_call.1} parent=31 // pred_region
          %s256 = sand.u32 %s32, 1
          %s257 = scalar_lea.sflag [#allocation3], %s256
          %s258 = sand.u32 %s32, 1
          %s259 = smul.addr %s258, 32
          %s260 = scalar_lea.vmem [#allocation2], %s259
          %s261 = smul.u32 4, %s22
          %263 = vsyncadd %s257, 0
          %s264 = smul.addr %s261, 8
          %s265 = scalar_lea.hbm %s0, %s264
          %s266 = sshll.u32 %s265, 4
          %s267 = int_to_ptr.hbm [resolvable:$true] %s266
          %s268 = sshll.u32 %s260, 4
          %s269 = int_to_ptr.vmem [resolvable:$true] %s268
          %274 = dma.hbm_to_vmem [thread:$0]  %s267, 512, %s269, %s257, 128, 128, 8
        $region36: #{tpu_custom_call.1} parent=31 // pred_fallthru
          _
      $region32: #{tpu_custom_call.1} parent=5 // pred_fallthru
        _
      %p275 = scmp.le.s32.totalorder 1, %s22
      %p276 = scmp.lt.s32.totalorder %s22, 3
      %p277 = pnand %p275, %p276
      %p278 = pneg %p277
      // Predicated region
      $region37: #{tpu_custom_call.1} parent=5 // pred_check
        _
      $region38: #{tpu_custom_call.1} parent=5 // pred_check_branch
        %280 = sbr.rel (%p277) target = $region40
      $region39: #{tpu_custom_call.1} parent=5 // pred_region
        %s281 = ssub.s32 %s22, 1
        %s282 = sand.u32 %s35, 1
        %s283 = scalar_lea.sflag [#allocation3], %s282
        %s284 = sand.u32 %s35, 1
        %s285 = smul.addr %s284, 32
        %s286 = scalar_lea.vmem [#allocation2], %s285
        // Predicated region
        $region41: #{tpu_custom_call.1} parent=39 // pred_check
          %p287 = pneg %p48
        $region42: #{tpu_custom_call.1} parent=39 // pred_check_branch
          %289 = sbr.rel (%p287) target = $region44
        $region43: #{tpu_custom_call.1} parent=39 // pred_region
          %291 = dma.done %s283, 512
        $region44: #{tpu_custom_call.1} parent=39 // pred_fallthru
          _
        // Predicated region
        $region45: #{tpu_custom_call.1} parent=39 // pred_check
          %p292 = pneg %p69
        $region46: #{tpu_custom_call.1} parent=39 // pred_check_branch
          %294 = sbr.rel (%p292) target = $region48
        $region47: #{tpu_custom_call.1} parent=39 // pred_region
          %296 = dma.done [#allocation6], 2048
        $region48: #{tpu_custom_call.1} parent=39 // pred_fallthru
          _
        // Predicated region
        $region49: #{tpu_custom_call.1} parent=39 // pred_check
          %p297 = pneg %p111
        $region50: #{tpu_custom_call.1} parent=39 // pred_check_branch
          %299 = sbr.rel (%p297) target = $region52
        $region51: #{tpu_custom_call.1} parent=39 // pred_region
          %301 = dma.done [#allocation6], 2048
        $region52: #{tpu_custom_call.1} parent=39 // pred_fallthru
          _
        %s302 = sand.u32 %s35, 1
        %s303 = scalar_lea.sflag [#allocation3], %s302
        %s304 = sand.u32 %s35, 1
        %s305 = smul.addr %s304, 32
        %s306 = scalar_lea.vmem [#allocation2], %s305
        %p307 = pneg %p48
        %p308 = pneg %p45
        %p309 = pneg %p69
        %p310 = pneg %p66
        %p311 = pneg %p90
        %p312 = pneg %p87
        %p313 = pneg %p111
        %p314 = pneg %p108
        %p315 = pneg %p132
        %p316 = pneg %p129
        %p317 = pneg %p158
        %p318 = pneg %p155
        %s319 = sand.u32 %s145, 1
        %s320 = scalar_lea.sflag [#allocation4], %s319
        %s321 = sand.u32 %s145, 1
        %s322 = smul.addr %s321, 32
        %s323 = scalar_lea.vmem [#allocation8], %s322
        %p324 = pneg %p179
        %p325 = pneg %p176
        %p326 = pneg %p200
        %p327 = pneg %p197
        %s328 = smul.u32 4, %s27
        %s329 = smul.u32 4, %s27
        %v330 = vld [vmem:[%s286] sm:$0xff]
        %v331 = vld [vmem:[%s286 + $0x8] sm:$0xff]
        %v332 = vld [vmem:[%s286 + $0x10] sm:$0xff]
        %v333 = vld [vmem:[%s286 + $0x18] sm:$0xff]
        %v334 = vld [vmem:[#allocation5] sm:$0xff]
        %v335 = vld [vmem:[#allocation5 + $0x8] sm:$0xff]
        %v336 = vld [vmem:[#allocation5 + $0x10] sm:$0xff]
        %v337 = vld [vmem:[#allocation5 + $0x18] sm:$0xff]
        %v338 = vld [vmem:[#allocation5 + $0x20] sm:$0xff]
        %v339 = vld [vmem:[#allocation5 + $0x28] sm:$0xff]
        %v340 = vld [vmem:[#allocation5 + $0x30] sm:$0xff]
        %v341 = vld [vmem:[#allocation5 + $0x38] sm:$0xff]
        %v342 = vld [vmem:[#allocation5 + $0x40] sm:$0xff]
        %v343 = vld [vmem:[#allocation5 + $0x48] sm:$0xff]
        %v344 = vld [vmem:[#allocation5 + $0x50] sm:$0xff]
        %v345 = vld [vmem:[#allocation5 + $0x58] sm:$0xff]
        %v346 = vld [vmem:[#allocation5 + $0x60] sm:$0xff]
        %v347 = vld [vmem:[#allocation5 + $0x68] sm:$0xff]
        %v348 = vld [vmem:[#allocation5 + $0x70] sm:$0xff]
        %v349 = vld [vmem:[#allocation5 + $0x78] sm:$0xff]
        %v350 = vld [vmem:[%s2] sm:$0x1]
        %v352 = vperm.slane %v350, 0
        %354 = vmatpush.msra.mxu0 %v349
        %355 = vmatpush.msra.mxu0 %v348
        %356 = vmatpush.msra.mxu0 %v347
        %357 = vmatpush.msra.mxu0 %v346
        %358 = vmatpush.msra.mxu0 %v345
        %359 = vmatpush.msra.mxu0 %v344
        %360 = vmatpush.msra.mxu0 %v343
        %361 = vmatpush.msra.mxu0 %v342
        %362 = vmatpush.msra.mxu0 %v341
        %363 = vmatpush.msra.mxu0 %v340
        %364 = vmatpush.msra.mxu0 %v339
        %365 = vmatpush.msra.mxu0 %v338
        %366 = vmatpush.msra.mxu0 %v337
        %367 = vmatpush.msra.mxu0 %v336
        %368 = vmatpush.msra.mxu0 %v335
        %369 = vmatpush.msra.mxu0 %v334
        %370 = vmatmul.f32.gmra.mxu0 %v330
        %v371 = vpop.f32.mrf.mxu0
        %v372 = vadd.f32 %v352, %v371
        %373 = vmatmul.f32.gmra.mxu0 %v331
        %v374 = vpop.f32.mrf.mxu0
        %v375 = vadd.f32 %v352, %v374
        %376 = vmatmul.f32.gmra.mxu0 %v332
        %v377 = vpop.f32.mrf.mxu0
        %v378 = vadd.f32 %v352, %v377
        %379 = vmatmul.f32.gmra.mxu0 %v333
        %v380 = vpop.f32.mrf.mxu0
        %v381 = vadd.f32 %v352, %v380
        %382 = vdwg.mxu0
        %v383 = vmax.f32 %v372, 0.0
        %v384 = vmax.f32 %v375, 0.0
        %v385 = vmax.f32 %v378, 0.0
        %v386 = vmax.f32 %v381, 0.0
        %v387 = vld [vmem:[#allocation7] sm:$0xff]
        %v388 = vld [vmem:[#allocation7 + $0x8] sm:$0xff]
        %v389 = vld [vmem:[#allocation7 + $0x10] sm:$0xff]
        %v390 = vld [vmem:[#allocation7 + $0x18] sm:$0xff]
        %v391 = vld [vmem:[#allocation7 + $0x20] sm:$0xff]
        %v392 = vld [vmem:[#allocation7 + $0x28] sm:$0xff]
        %v393 = vld [vmem:[#allocation7 + $0x30] sm:$0xff]
        %v394 = vld [vmem:[#allocation7 + $0x38] sm:$0xff]
        %v395 = vld [vmem:[#allocation7 + $0x40] sm:$0xff]
        %v396 = vld [vmem:[#allocation7 + $0x48] sm:$0xff]
        %v397 = vld [vmem:[#allocation7 + $0x50] sm:$0xff]
        %v398 = vld [vmem:[#allocation7 + $0x58] sm:$0xff]
        %v399 = vld [vmem:[#allocation7 + $0x60] sm:$0xff]
        %v400 = vld [vmem:[#allocation7 + $0x68] sm:$0xff]
        %v401 = vld [vmem:[#allocation7 + $0x70] sm:$0xff]
        %v402 = vld [vmem:[#allocation7 + $0x78] sm:$0xff]
        %v403 = vld [vmem:[%s4] sm:$0x1]
        %v405 = vperm.slane %v403, 0
        %407 = vmatpush.msra.mxu0 %v402
        %408 = vmatpush.msra.mxu0 %v401
        %409 = vmatpush.msra.mxu0 %v400
        %410 = vmatpush.msra.mxu0 %v399
        %411 = vmatpush.msra.mxu0 %v398
        %412 = vmatpush.msra.mxu0 %v397
        %413 = vmatpush.msra.mxu0 %v396
        %414 = vmatpush.msra.mxu0 %v395
        %415 = vmatpush.msra.mxu0 %v394
        %416 = vmatpush.msra.mxu0 %v393
        %417 = vmatpush.msra.mxu0 %v392
        %418 = vmatpush.msra.mxu0 %v391
        %419 = vmatpush.msra.mxu0 %v390
        %420 = vmatpush.msra.mxu0 %v389
        %421 = vmatpush.msra.mxu0 %v388
        %422 = vmatpush.msra.mxu0 %v387
        %423 = vmatmul.f32.gmra.mxu0 %v383
        %v424 = vpop.f32.mrf.mxu0
        %v425 = vadd.f32 %v405, %v424
        %426 = vmatmul.f32.gmra.mxu0 %v384
        %v427 = vpop.f32.mrf.mxu0
        %v428 = vadd.f32 %v405, %v427
        %429 = vmatmul.f32.gmra.mxu0 %v385
        %v430 = vpop.f32.mrf.mxu0
        %v431 = vadd.f32 %v405, %v430
        %432 = vmatmul.f32.gmra.mxu0 %v386
        %v433 = vpop.f32.mrf.mxu0
        %v434 = vadd.f32 %v405, %v433
        %435 = vdwg.mxu0
        %436 = vst [vmem:[%s323] sm:$0xff] %v425
        %437 = vst [vmem:[%s323 + $0x8] sm:$0xff] %v428
        %438 = vst [vmem:[%s323 + $0x10] sm:$0xff] %v431
        %439 = vst [vmem:[%s323 + $0x18] sm:$0xff] %v434
        %p440 = scmp.eq.s32.totalorder %s27, 0
        // Predicated region
        $region53: #{tpu_custom_call.1} parent=39 // pred_check
          %p441 = pneg %p440
        $region54: #{tpu_custom_call.1} parent=39 // pred_check_branch
          %443 = sbr.rel (%p441) target = $region56
        $region55: #{tpu_custom_call.1} parent=39 // pred_region
          %444 = vst [vmem:[#allocation9] sm:$0x1] 0.0
          %445 = vst [vmem:[#allocation11] sm:$0x1] 0.0
        $region56: #{tpu_custom_call.1} parent=39 // pred_fallthru
          _
        %v446 = vlaneseq
        %v447 = vshrl.u32 %v446, 7
        %v448 = vadd.s32 %v447, 8
        %v449 = vadd.s32 %v447, 16
        %v450 = vadd.s32 %v447, 24
        %s451 = smul.u32 %s27, 32
        %v452 = vstv %s451
        %v453 = vadd.s32 %v447, %v452
        %v454 = vadd.s32 %v448, %v452
        %v455 = vadd.s32 %v449, %v452
        %v456 = vadd.s32 %v450, %v452
        %vm457 = vcmp.lt.s32.totalorder %v453, 48
        %vm458 = vcmp.lt.s32.totalorder %v454, 48
        %vm459 = vcmp.lt.s32.totalorder %v455, 48
        %vm460 = vcmp.lt.s32.totalorder %v456, 48
        %v461 = vsel %vm457, 1, 0
        %v462 = vsel %vm458, 1, 0
        %v463 = vsel %vm459, 1, 0
        %v464 = vsel %vm460, 1, 0
        %v465 = vcvt.s32.f32 %v461
        %v466 = vcvt.s32.f32 %v462
        %v467 = vcvt.s32.f32 %v463
        %v468 = vcvt.s32.f32 %v464
        %v469 = vmul.f32 %v425, %v465
        %v470 = vmul.f32 %v428, %v466
        %v471 = vmul.f32 %v431, %v467
        %v472 = vmul.f32 %v434, %v468
        %v473 = vld [vmem:[#allocation9] sm:$0x1]
        %v474 = vadd.f32 %v469, %v470
        %v475 = vadd.f32 %v474, %v471
        %v476 = vadd.f32 %v475, %v472
        %v477 = vrot.slane %v476, 4
        %v478 = vadd.f32 %v476, %v477
        %v479 = vrot.slane %v478, 2
        %v480 = vadd.f32 %v478, %v479
        %v481 = vrot.slane %v480, 1
        %v482 = vadd.f32 %v480, %v481
        %v483 = vadd.f32 %v473, %v482
        %484 = vst [vmem:[#allocation9] sm:$0x1] %v483
        %v485 = vld [vmem:[#allocation11] sm:$0x1]
        %v486 = vmul.f32 %v469, %v425
        %v487 = vmul.f32 %v470, %v428
        %v488 = vmul.f32 %v471, %v431
        %v489 = vmul.f32 %v472, %v434
        %v490 = vadd.f32 %v486, %v487
        %v491 = vadd.f32 %v490, %v488
        %v492 = vadd.f32 %v491, %v489
        %v493 = vrot.slane %v492, 4
        %v494 = vadd.f32 %v492, %v493
        %v495 = vrot.slane %v494, 2
        %v496 = vadd.f32 %v494, %v495
        %v497 = vrot.slane %v496, 1
        %v498 = vadd.f32 %v496, %v497
        %v499 = vadd.f32 %v485, %v498
        %500 = vst [vmem:[#allocation11] sm:$0x1] %v499
        %s501 = sand.u32 %s145, 1
        %s502 = scalar_lea.sflag [#allocation4], %s501
        %s503 = sand.u32 %s145, 1
        %s504 = smul.addr %s503, 32
        %s505 = scalar_lea.vmem [#allocation8], %s504
        // Predicated region
        $region57: #{tpu_custom_call.1} parent=39 // pred_check
          %p506 = pneg %p155
        $region58: #{tpu_custom_call.1} parent=39 // pred_check_branch
          %508 = sbr.rel (%p506) target = $region60
        $region59: #{tpu_custom_call.1} parent=39 // pred_region
          %s509 = smul.u32 4, %s27
          %511 = vsyncadd %s502, 0
          %s512 = smul.addr %s509, 8
          %s513 = scalar_lea.hbm %s5, %s512
          %s514 = sshll.u32 %s505, 4
          %s515 = int_to_ptr.vmem [resolvable:$true] %s514
          %s516 = sshll.u32 %s513, 4
          %s517 = int_to_ptr.hbm [resolvable:$true] %s516
          %522 = dma.vmem_to_hbm [thread:$0]  %s515, 512, %s517, %s502, 128, 128, 8
        $region60: #{tpu_custom_call.1} parent=39 // pred_fallthru
          _
        // Predicated region
        $region61: #{tpu_custom_call.1} parent=39 // pred_check
          %p523 = pneg %p176
        $region62: #{tpu_custom_call.1} parent=39 // pred_check_branch
          %525 = sbr.rel (%p523) target = $region64
        $region63: #{tpu_custom_call.1} parent=39 // pred_region
          %527 = vsyncadd [#allocation10], 0
          %s529 = sshll.u32 [#allocation9], 4
          %s530 = int_to_ptr.vmem [resolvable:$true] %s529
          %s531 = sshll.u32 %s6, 4
          %s532 = int_to_ptr.hbm [resolvable:$true] %s531
          %534 = dma.vmem_to_hbm [thread:$0]  %s530, 16, %s532, [#allocation10]
        $region64: #{tpu_custom_call.1} parent=39 // pred_fallthru
          _
        // Predicated region
        $region65: #{tpu_custom_call.1} parent=39 // pred_check
          %p535 = pneg %p197
        $region66: #{tpu_custom_call.1} parent=39 // pred_check_branch
          %537 = sbr.rel (%p535) target = $region68
        $region67: #{tpu_custom_call.1} parent=39 // pred_region
          %539 = vsyncadd [#allocation10], 0
          %s541 = sshll.u32 [#allocation11], 4
          %s542 = int_to_ptr.vmem [resolvable:$true] %s541
          %s543 = sshll.u32 %s7, 4
          %s544 = int_to_ptr.hbm [resolvable:$true] %s543
          %546 = dma.vmem_to_hbm [thread:$0]  %s542, 16, %s544, [#allocation10]
        $region68: #{tpu_custom_call.1} parent=39 // pred_fallthru
          _
        // Predicated region
        $region69: #{tpu_custom_call.1} parent=39 // pred_check
          %p547 = pneg %p176
        $region70: #{tpu_custom_call.1} parent=39 // pred_check_branch
          %549 = sbr.rel (%p547) target = $region72
        $region71: #{tpu_custom_call.1} parent=39 // pred_region
          %551 = dma.done [#allocation10], 16
        $region72: #{tpu_custom_call.1} parent=39 // pred_fallthru
          _
        // Predicated region
        $region73: #{tpu_custom_call.1} parent=39 // pred_check
          %p552 = pneg %p197
        $region74: #{tpu_custom_call.1} parent=39 // pred_check_branch
          %554 = sbr.rel (%p552) target = $region76
        $region75: #{tpu_custom_call.1} parent=39 // pred_region
          %556 = dma.done [#allocation10], 16
        $region76: #{tpu_custom_call.1} parent=39 // pred_fallthru
          _
      $region40: #{tpu_custom_call.1} parent=5 // pred_fallthru
        _
      %p557 = scmp.le.s32.totalorder 2, %s22
      // Predicated region
      $region77: #{tpu_custom_call.1} parent=5 // pred_check
        %p558 = pneg %p557
      $region78: #{tpu_custom_call.1} parent=5 // pred_check_branch
        %560 = sbr.rel (%p558) target = $region80
      $region79: #{tpu_custom_call.1} parent=5 // pred_region
        %s561 = ssub.s32 %s22, 2
        // Predicated region
        $region81: #{tpu_custom_call.1} parent=79 // pred_check
          %p562 = pneg %p161
        $region82: #{tpu_custom_call.1} parent=79 // pred_check_branch
          %564 = sbr.rel (%p562) target = $region84
        $region83: #{tpu_custom_call.1} parent=79 // pred_region
          %s565 = sand.u32 %s146, 1
          %s566 = scalar_lea.sflag [#allocation4], %s565
          %s567 = sand.u32 %s146, 1
          %s568 = smul.addr %s567, 32
          %s569 = scalar_lea.vmem [#allocation8], %s568
          %571 = dma.done %s566, 512
        $region84: #{tpu_custom_call.1} parent=79 // pred_fallthru
          _
      $region80: #{tpu_custom_call.1} parent=5 // pred_fallthru
        _
    $region6: #{tpu_custom_call.1} parent=1 // loop_footer
      %s26 = sadd.s32 1, %s22
    $region7: #{tpu_custom_call.1} parent=1 // loop_footer_branch
      %21 = sbr.rel target = $region3
    $region8: #{tpu_custom_call.1} parent=1 // loop_exit
      _
    %572 = vsyncpa [#allocation3], 1
    %s573 = scalar_lea.sflag [#allocation3], 1
    %574 = vsyncpa %s573, 1
    %575 = vsyncpa [#allocation6], 1
    %576 = vsyncpa [#allocation4], 1
    %s577 = scalar_lea.sflag [#allocation4], 1
    %578 = vsyncpa %s577, 1
    %579 = vsyncpa [#allocation10], 1

</llo_original>
